<compile_context>
chip_gen: v7x
topology: tpu7x:2x2x1
jax: 0.10.0
libtpu: 0.0.40
codegen_flags: <defaults>
</compile_context>

<pallas_src>
import math
import jax
import jax.numpy as jnp
from jax.experimental import pallas as pl
from jax.experimental.pallas import tpu as pltpu

_FREQ_MAP = {'h': 4, 't': 5, 's': 6, 'm': 1, 'a': 1, 'w': 2, 'd': 3, 'b': 3}


def _round_up(n, m):
    return ((n + m - 1) // m) * m


def _sublane(dtype):
    # Native second-to-last tile: 8 for 4-byte, 16 for 2-byte, 32 for 1-byte dtypes.
    return max(8, 32 // jnp.dtype(dtype).itemsize)


def _linear_kernel(x_ref, w_ref, o_ref):
    # x_ref: (tm, K)   w_ref: (K, N)   o_ref: (tm, N) — single MXU matmul, f32 accumulate.
    o_ref[...] = jnp.dot(
        x_ref[...], w_ref[...], preferred_element_type=jnp.float32
    ).astype(o_ref.dtype)


def time_feature_embedding(x, weight, *, block_rows=2048):
    """x: (..., d_inp); weight: (d_model, d_inp) (PyTorch nn.Linear layout, no bias).
    Returns x @ weight.T with shape (..., d_model)."""
    *lead, d_inp = x.shape
    d_model, d_inp_w = weight.shape
    assert d_inp == d_inp_w, (d_inp, d_inp_w)

    out_dtype = x.dtype
    M = int(math.prod(lead)) if lead else 1

    w_t = weight.T                                     # (d_inp, d_model), keep f32

    # Lane-packing for narrow d_model: fold g rows into the lane dim so the output is
    # exactly 128 lanes wide (unmasked vst, no wasted output bytes).
    g = 1
    if d_model < 128 and 128 % d_model == 0:
        g_cand = 128 // d_model
        if M >= g_cand and M % g_cand == 0:
            g = g_cand

    if g > 1:
        K, N = g * d_inp, g * d_model                  # N == 128
        x2 = x.reshape(M // g, K)                      # free: same row-major bytes
        w2 = jnp.kron(jnp.eye(g, dtype=w_t.dtype), w_t)  # block-diagonal (K, 128)
    else:
        K, N = d_inp, d_model
        x2 = x.reshape(M, K)
        w2 = w_t
    M_rows = x2.shape[0]

    # --- row tile selection ------------------------------------------------------
    sub = max(_sublane(x.dtype), _sublane(out_dtype))
    if M_rows <= sub:
        tm = M_rows                                    # single block, full-dim (valid)
    else:
        # VMEM budget: double-buffered input (lane-padded K -> 128) + output blocks.
        vmem_budget = 12 * 1024 * 1024                 # safe under v5e's 16 MiB default scoped
        bytes_per_row = 2 * (
            _round_up(K, 128) * jnp.dtype(x.dtype).itemsize
            + _round_up(N, 128) * jnp.dtype(out_dtype).itemsize)
        tm_budget = max(sub, (vmem_budget // bytes_per_row) // sub * sub)
        tm = min(_round_up(block_rows, sub), tm_budget, _round_up(M_rows, sub))
        if pl.cdiv(M_rows, tm) < 2:
            # >=2 grid steps so v7x can fan the 'parallel' axis across its 2 TensorCores.
            tm = _round_up(pl.cdiv(M_rows, 2), sub)

    cost = pl.CostEstimate(
        flops=2 * M * d_inp * d_model,
        transcendentals=0,
        bytes_accessed=int(M * d_inp * jnp.dtype(x.dtype).itemsize
                           + M * d_model * jnp.dtype(out_dtype).itemsize
                           + d_inp * d_model * jnp.dtype(weight.dtype).itemsize),
    )

    out = pl.pallas_call(
        _linear_kernel,
        out_shape=jax.ShapeDtypeStruct((M_rows, N), out_dtype),
        grid_spec=pltpu.PrefetchScalarGridSpec(
            num_scalar_prefetch=0,
            grid=(pl.cdiv(M_rows, tm),),
            in_specs=[
                pl.BlockSpec((tm, K), lambda i: (i, 0)),
                pl.BlockSpec((K, N), lambda i: (0, 0)),   # tiny weight, DMA'd once
            ],
            out_specs=pl.BlockSpec((tm, N), lambda i: (i, 0)),
        ),
        compiler_params=pltpu.CompilerParams(
            dimension_semantics=("parallel",)),
        cost_estimate=cost,
    )(x2, w2)

    # Both reshapes are free (row-major bitcasts): (M_rows, N) -> (M, d_model) -> (..., d_model)
    return out.reshape(M, d_model).reshape(*lead, d_model)


def make_linear_weight(key, d_inp, d_model):
    # nn.Linear default init: kaiming_uniform_(a=sqrt(5)) -> U(-1/sqrt(fan_in), 1/sqrt(fan_in))
    bound = 1.0 / math.sqrt(d_inp)
    return jax.random.uniform(key, (d_model, d_inp), dtype=jnp.float32,
                              minval=-bound, maxval=bound)


if __name__ == "__main__":
    B, L, d_model, freq = 2, 8, 32, 'h'
    d_inp = _FREQ_MAP[freq]                       # 4 for freq='h'

    key = jax.random.PRNGKey(0)
    kx, kw = jax.random.split(key)
    x = jax.random.normal(kx, (B, L, d_inp), dtype=jnp.float32)
    weight = make_linear_weight(kw, d_inp, d_model)   # (d_model, d_inp)

    out = jax.block_until_ready(time_feature_embedding(x, weight))

    # Plain-JAX reference of the same math: y = x @ W.T
    ref = jnp.einsum('bld,md->blm', x, weight)
    assert out.shape == (B, L, d_model)
    assert jnp.allclose(out, ref, atol=1e-5, rtol=1e-5), "mismatch vs reference"

    print("KERNEL_OK")
</pallas_src>

<mosaic_0001>
module attributes {stable_mosaic.version = 11 : i64} {
  func.func @_linear_kernel(%arg0: i32, %arg1: memref<4x16xf32, #tpu.memory_space<vmem>>, %arg2: memref<16x128xf32, #tpu.memory_space<vmem>>, %arg3: memref<4x128xf32, #tpu.memory_space<vmem>>) attributes {dimension_semantics = [#tpu.dimension_semantics<parallel>], iteration_bounds = array<i64: 1>, scalar_prefetch = 0 : i64, scratch_operands = 0 : i64, tpu.core_type = #tpu.core_type<tc>, window_params = [{transform_indices = @transform_0, window_bounds = array<i64: 4, 16>}, {pipeline_mode = #tpu.pipeline_mode<synchronous>, transform_indices = @transform_1, window_bounds = array<i64: 16, 128>}, {transform_indices = @transform_2, window_bounds = array<i64: 4, 128>}]} {
    %c0 = arith.constant 0 : index
    %c0_0 = arith.constant 0 : index
    %0 = vector.load %arg1[%c0, %c0_0] : memref<4x16xf32, #tpu.memory_space<vmem>>, vector<4x16xf32>
    %c0_1 = arith.constant 0 : index
    %c0_2 = arith.constant 0 : index
    %1 = vector.load %arg2[%c0_1, %c0_2] : memref<16x128xf32, #tpu.memory_space<vmem>>, vector<16x128xf32>
    %cst = arith.constant dense<0.000000e+00> : vector<4x128xf32>
    %2 = tpu.matmul %0, %1, %cst {dimension_numbers = #tpu.dot_dimension_numbers<[1], [0], [0], [1], [0, 0, 1, 1], [], []>} : vector<4x16xf32>, vector<16x128xf32>, vector<4x128xf32> -> vector<4x128xf32>
    %c0_3 = arith.constant 0 : index
    %c0_4 = arith.constant 0 : index
    %3 = vector.load %arg3[%c0_3, %c0_4] : memref<4x128xf32, #tpu.memory_space<vmem>>, vector<4x128xf32>
    tpu.vector_store %arg3[%c0_3, %c0_4], %2 {strides = array<i32>} : memref<4x128xf32, #tpu.memory_space<vmem>>, vector<4x128xf32>,
    return
  }
  func.func @transform_0(%arg0: i32) -> (i32, i32) {
    %c0_i32 = arith.constant 0 : i32
    %c0_i32_0 = arith.constant 0 : i32
    return %arg0, %c0_i32 : i32, i32
  }
  func.func @transform_1(%arg0: i32) -> (i32, i32) {
    %c0_i32 = arith.constant 0 : i32
    %c0_i32_0 = arith.constant 0 : i32
    %c0_i32_1 = arith.constant 0 : i32
    return %c0_i32, %c0_i32_0 : i32, i32
  }
  func.func @transform_2(%arg0: i32) -> (i32, i32) {
    %c0_i32 = arith.constant 0 : i32
    %c0_i32_0 = arith.constant 0 : i32
    return %arg0, %c0_i32 : i32, i32
  }
}

</mosaic_0001>

<llo_original>
// kernel: tpu_custom_call.1
$region0: #{tpu_custom_call.1}
  #allocation0 [shape = 'u32[]', space=smem, size = 0x4, offset = 0x4, fixed_abs, tag = 'smem constant byte address 0x4 - core index']
  #allocation1 [shape = 'u32[144,128]{1,0:T(1,128)}', space=vmem, size = 0x12000, scoped, tag = 'internal scratch']
  %s0 = inlined_call_operand.hbm [shape: f32[4,16], index: 0, kind: input, shape index: {}]
  %s1 = inlined_call_operand.hbm [shape: f32[16,128], index: 1, kind: input, shape index: {}]
  %s2 = inlined_call_operand.hbm [shape: f32[4,128], index: 2, kind: output, shape index: {}]
  %s3 = sld [smem:[#allocation0]]
  $region26: #{tpu_custom_call.1} parent=0
    _
  %s5 = ssub.s32 1, %s3
  %s6 = scalar_select 0, %s5, %s3
  $region1: #{tpu_custom_call.1} parent=0
    #allocation2 [shape = 'u8[2048]{0}', space=vmem, size = 0x800, scoped, tag = 'input window, operand 0, single buffered']
    #allocation3 [shape = 's32[1]{0}', space=sflag, size = 0x4, scoped, tag = 'scoped memory for tpu_custom_call.1']
    #allocation4 [shape = 's32[1]{0}', space=sflag, size = 0x4, scoped, tag = 'scoped memory for tpu_custom_call.1']
    #allocation5 [shape = 'u8[8192]{0}', space=vmem, size = 0x2000, scoped, tag = 'input window, operand 1, single buffered']
    #allocation6 [shape = 's32[1]{0}', space=sflag, size = 0x4, scoped, tag = 'scoped memory for tpu_custom_call.1']
    #allocation7 [shape = 'u8[2048]{0}', space=vmem, size = 0x800, scoped, tag = 'output window, operand 0, single buffered']
    %7 = vsyncpa [#allocation3], 0
    %8 = vsyncpa [#allocation6], 0
    %9 = vsyncpa [#allocation4], 0
    // Predicated region
    $region2: #{tpu_custom_call.1} parent=1 // pred_check
      _
    $region3: #{tpu_custom_call.1} parent=1 // pred_check_branch
      %11 = sbr.rel (0) target = $region5
    $region4: #{tpu_custom_call.1} parent=1 // pred_region
      %s13 = ssub.s32 64, 64
      %14 = vsyncadd [#allocation3], %s13
      %s16 = sshll.u32 [#allocation2], 4
      %s17 = int_to_ptr.vmem [resolvable:$true] %s16
      %19 = dma.hbm_to_vmem [thread:$0]  %s0, 64, %s17, [#allocation3]
    $region5: #{tpu_custom_call.1} parent=1 // pred_fallthru
      _
    // Predicated region
    $region6: #{tpu_custom_call.1} parent=1 // pred_check
      _
    $region7: #{tpu_custom_call.1} parent=1 // pred_check_branch
      %21 = sbr.rel (0) target = $region9
    $region8: #{tpu_custom_call.1} parent=1 // pred_region
      %s23 = ssub.s32 256, 256
      %24 = vsyncadd [#allocation6], %s23
      %s25 = sshll.u32 [#allocation5], 4
      %s26 = int_to_ptr.vmem [resolvable:$true] %s25
      %31 = dma.hbm_to_vmem [thread:$0]  %s1, 256, %s26, [#allocation6], 128, 128, 8
    $region9: #{tpu_custom_call.1} parent=1 // pred_fallthru
      _
    // Predicated region
    $region10: #{tpu_custom_call.1} parent=1 // pred_check
      _
    $region11: #{tpu_custom_call.1} parent=1 // pred_check_branch
      %33 = sbr.rel (0) target = $region13
    $region12: #{tpu_custom_call.1} parent=1 // pred_region
      %34 = dma.done [#allocation3], 64
    $region13: #{tpu_custom_call.1} parent=1 // pred_fallthru
      _
    // Predicated region
    $region14: #{tpu_custom_call.1} parent=1 // pred_check
      _
    $region15: #{tpu_custom_call.1} parent=1 // pred_check_branch
      %36 = sbr.rel (0) target = $region17
    $region16: #{tpu_custom_call.1} parent=1 // pred_region
      %37 = dma.done [#allocation6], 256
    $region17: #{tpu_custom_call.1} parent=1 // pred_fallthru
      _
    %v38 = vld [vmem:[#allocation2] sm:$0xf]
    %v39 = vld [vmem:[#allocation5] sm:$0xff]
    %v40 = vld [vmem:[#allocation5 + $0x8] sm:$0xff]
    %vm41 = vcmask 130048
    %v43 = vsel %vm41, %v38, 0
    %45 = vmatprep.subr.mxu0 0.0
    %46 = vmatpush1.msra.mxu0 %v39
    %47 = vmatprep.subr.mxu0 0.0
    %48 = vmatpush1.msra.mxu0 %v40
    %49 = vmatprep.subr.mxu0 0.0
    %50 = vmatpush1.msra.mxu0 0.0
    %51 = vmatprep.subr.mxu0 0.0
    %52 = vmatpush1.msra.mxu0 0.0
    %53 = vmatprep.subr.mxu0 0.0
    %54 = vmatpush1.msra.mxu0 0.0
    %55 = vmatprep.subr.mxu0 0.0
    %56 = vmatpush1.msra.mxu0 0.0
    %57 = vmatprep.subr.mxu0 0.0
    %58 = vmatpush1.msra.mxu0 0.0
    %59 = vmatprep.subr.mxu0 0.0
    %60 = vmatpush1.msra.mxu0 0.0
    %61 = vmatprep.subr.mxu0 0.0
    %62 = vmatpush1.msra.mxu0 0.0
    %63 = vmatprep.subr.mxu0 0.0
    %64 = vmatpush1.msra.mxu0 0.0
    %65 = vmatprep.subr.mxu0 0.0
    %66 = vmatpush1.msra.mxu0 0.0
    %67 = vmatprep.subr.mxu0 0.0
    %68 = vmatpush1.msra.mxu0 0.0
    %69 = vmatprep.subr.mxu0 0.0
    %70 = vmatpush1.msra.mxu0 0.0
    %71 = vmatprep.subr.mxu0 0.0
    %72 = vmatpush1.msra.mxu0 0.0
    %73 = vmatprep.subr.mxu0 0.0
    %74 = vmatpush1.msra.mxu0 0.0
    %75 = vmatprep.subr.mxu0 0.0
    %76 = vmatpush1.msra.mxu0 0.0
    %77 = vmatprep.subr.mxu0 0.0
    %78 = vmatpush1.msra.mxu0 0.0
    %79 = vmatprep.subr.mxu0 0.0
    %80 = vmatpush1.msra.mxu0 0.0
    %81 = vmatprep.subr.mxu0 0.0
    %82 = vmatpush1.msra.mxu0 0.0
    %83 = vmatprep.subr.mxu0 0.0
    %84 = vmatpush1.msra.mxu0 0.0
    %85 = vmatprep.subr.mxu0 0.0
    %86 = vmatpush1.msra.mxu0 0.0
    %87 = vmatprep.subr.mxu0 0.0
    %88 = vmatpush1.msra.mxu0 0.0
    %89 = vmatprep.subr.mxu0 0.0
    %90 = vmatpush1.msra.mxu0 0.0
    %91 = vmatprep.subr.mxu0 0.0
    %92 = vmatpush1.msra.mxu0 0.0
    %93 = vmatprep.subr.mxu0 0.0
    %94 = vmatpush1.msra.mxu0 0.0
    %95 = vmatprep.subr.mxu0 0.0
    %96 = vmatpush1.msra.mxu0 0.0
    %97 = vmatprep.subr.mxu0 0.0
    %98 = vmatpush1.msra.mxu0 0.0
    %99 = vmatprep.subr.mxu0 0.0
    %100 = vmatpush1.msra.mxu0 0.0
    %101 = vmatprep.subr.mxu0 0.0
    %102 = vmatpush1.msra.mxu0 0.0
    %103 = vmatprep.subr.mxu0 0.0
    %104 = vmatpush1.msra.mxu0 0.0
    %105 = vmatprep.subr.mxu0 0.0
    %106 = vmatpush1.msra.mxu0 0.0
    %107 = vmatprep.subr.mxu0 0.0
    %108 = vmatpush1.msra.mxu0 0.0
    %109 = vmatprep.mubr.f32.mxu0 0.0
    %110 = vmatmul.mubr.f32.gmra.mrb[0].mxu0 %v43
    %v111 = vpop.f32.mrb[0].mxu0
    %v112 = vadd.f32 0.0, %v111
    %v113 = vpop.f32.mrb[0].mxu0
    %114 = vdwg.mxu0
    %115 = vst [vmem:[#allocation7] sm:$0xf] %v112
    // Predicated region
    $region18: #{tpu_custom_call.1} parent=1 // pred_check
      _
    $region19: #{tpu_custom_call.1} parent=1 // pred_check_branch
      %117 = sbr.rel (0) target = $region21
    $region20: #{tpu_custom_call.1} parent=1 // pred_region
      %s119 = ssub.s32 64, 64
      %120 = vsyncadd [#allocation4], %s119
      %s122 = sshll.u32 [#allocation7], 4
      %s123 = int_to_ptr.vmem [resolvable:$true] %s122
      %125 = dma.vmem_to_hbm [thread:$0]  %s123, 64, %s2, [#allocation4]
    $region21: #{tpu_custom_call.1} parent=1 // pred_fallthru
      _
    // Predicated region
    $region22: #{tpu_custom_call.1} parent=1 // pred_check
      _
    $region23: #{tpu_custom_call.1} parent=1 // pred_check_branch
      %127 = sbr.rel (0) target = $region25
    $region24: #{tpu_custom_call.1} parent=1 // pred_region
      %128 = dma.done [#allocation4], 64
    $region25: #{tpu_custom_call.1} parent=1 // pred_fallthru
      _
    %129 = vsyncpa [#allocation3], 1
    %130 = vsyncpa [#allocation6], 1
    %131 = vsyncpa [#allocation4], 1

</llo_original>
